<compile_context>
chip_gen: v5e
topology: v5e:2x2
jax: 0.10.0
libtpu: 0.0.40
codegen_flags: <defaults>
</compile_context>

<pallas_src>
import functools
from typing import NamedTuple

import jax
import jax.numpy as jnp
from jax.experimental import pallas as pl
from jax.experimental.pallas import tpu as pltpu

# Stand-ins for cfg.TEXT_DIMENSION / cfg.GAN_CONDITION_DIM
TEXT_DIMENSION = 32
GAN_CONDITION_DIM = 16
BATCH = 8

LANE = 128
SUBLANE = 8


def _round_up(x, m):
    return (x + m - 1) // m * m


class CaNetParams(NamedTuple):
    w_t: jax.Array      # (T, 2C)  raw pre-transposed nn.Linear weight (fallback path)
    b: jax.Array        # (2C,)    raw bias (fallback path)
    w_pad: jax.Array    # (Tp, Fp) zero-padded weight, one 128-lane output slab
    b_pad: jax.Array    # (1, Fp)  zero-padded bias
    perm: jax.Array     # (Fp, Cp) 0/1 matrix moving logvar lanes [C,2C) -> [0,C)


def ca_net_prepare_params(weight_t, bias):
    """Pad / pack the nn.Linear parameters ONCE (hoisted out of the hot path)."""
    T, two_c = weight_t.shape
    C = two_c // 2
    Tp = _round_up(T, LANE)
    Fp = _round_up(two_c, LANE)     # 2C <= 128  ->  a single 128-lane slab
    Cp = _round_up(C, LANE)

    weight_t = weight_t.astype(jnp.float32)
    bias = bias.astype(jnp.float32)

    w_pad = jnp.pad(weight_t, ((0, Tp - T), (0, Fp - two_c)))
    b_pad = jnp.pad(bias, (0, Fp - two_c)).reshape(1, Fp)

    # Exact 0/1 permutation: perm[C + j, j] = 1 for j in [0, C).
    rows = jnp.arange(Fp)[:, None]
    cols = jnp.arange(Cp)[None, :]
    perm = ((rows == cols + C) & (cols < C)).astype(jnp.float32)

    return CaNetParams(weight_t, bias, w_pad, b_pad, perm)


def _ca_net_kernel(text_ref, w_ref, b_ref, perm_ref, eps_ref, x_ref, c_ref):
    # fc + bias + ReLU: (Bt, Tp) @ (Tp, Fp) on the MXU, f32 accumulation.
    x = jnp.dot(text_ref[...], w_ref[...], preferred_element_type=jnp.float32)
    x = jnp.maximum(x + b_ref[...], 0.0)

    # Lane-align logvar (cols [C, 2C)) with mu (cols [0, C)) via an exact 0/1
    # permutation matmul.  The MXU is otherwise idle here, the result is
    # bit-exact in f32, and it keeps every store full-lane / unmasked.
    logvar_aligned = jnp.dot(x, perm_ref[...], preferred_element_type=jnp.float32)

    # reparametrize: std = exp(0.5*logvar) on the EUP, fused mul-add on the VPU.
    std = jnp.exp(0.5 * logvar_aligned)
    c = eps_ref[...] * std + x[:, : c_ref.shape[-1]]     # lanes [0, C) are valid

    x_ref[...] = x.astype(x_ref.dtype)
    c_ref[...] = c.astype(c_ref.dtype)


def _ca_net_jax(text, w_t, b, eps):
    """Fused pure-JAX reference / small-batch fallback."""
    x = jnp.maximum(text @ w_t + b[None, :], 0.0)
    C = w_t.shape[1] // 2
    mu, logvar = x[:, :C], x[:, C:]
    return eps * jnp.exp(0.5 * logvar) + mu, mu, logvar


def ca_net_forward(text_embedding, eps, params: CaNetParams,
                   *, force_pallas=False, min_pallas_batch=256):
    """text_embedding: (B, T) f32, eps: (B, C) f32 ~ N(0,1).

    Returns (c_code, mu, logvar), each (B, C) f32.
    """
    B, T = text_embedding.shape
    two_c = params.w_t.shape[1]
    C = two_c // 2
    assert eps.shape == (B, C)

    # Overhead-bound regime: one XLA-fused dense+relu+exp+FMA beats padding
    # plus a pallas_call launch at tiny batch sizes.
    if not force_pallas and B < min_pallas_batch:
        return _ca_net_jax(text_embedding, params.w_t, params.b, eps)

    Tp, Fp = params.w_pad.shape
    Cp = params.perm.shape[1]

    # Row tiling: up to 512 rows per step; if the batch spans more than one
    # minimal tile, make the grid >= 2 steps so both v7x TensorCores get work.
    Bp = _round_up(B, SUBLANE)
    b_tile = min(512, _round_up(max(Bp // 2, SUBLANE), SUBLANE))
    Bp = _round_up(Bp, b_tile)
    grid = (Bp // b_tile,)

    # Hot-path padding: a single jnp.pad per activation input.
    text_p = jnp.pad(text_embedding.astype(jnp.float32),
                     ((0, Bp - B), (0, Tp - T)))
    eps_p = jnp.pad(eps.astype(jnp.float32), ((0, Bp - B), (0, Cp - C)))

    out_shapes = (
        jax.ShapeDtypeStruct((Bp, Fp), jnp.float32),   # x = relu(fc(text))
        jax.ShapeDtypeStruct((Bp, Cp), jnp.float32),   # c_code (lanes [0,C) valid)
    )

    x_pad, c_pad = pl.pallas_call(
        _ca_net_kernel,
        out_shape=out_shapes,
        grid=grid,
        in_specs=[
            pl.BlockSpec((b_tile, Tp), lambda i: (i, 0)),
            pl.BlockSpec((Tp, Fp), lambda i: (0, 0)),
            pl.BlockSpec((1, Fp), lambda i: (0, 0)),
            pl.BlockSpec((Fp, Cp), lambda i: (0, 0)),
            pl.BlockSpec((b_tile, Cp), lambda i: (i, 0)),
        ],
        out_specs=(
            pl.BlockSpec((b_tile, Fp), lambda i: (i, 0)),
            pl.BlockSpec((b_tile, Cp), lambda i: (i, 0)),
        ),
        compiler_params=pltpu.CompilerParams(
            dimension_semantics=("parallel",)),
    )(text_p, params.w_pad, params.b_pad, params.perm, eps_p)

    # Free layout slicing in the wrapper (128-lane slab -> (B, C) views).
    mu = x_pad[:B, :C]
    logvar = x_pad[:B, C:two_c]
    c_code = c_pad[:B, :C]
    return c_code, mu, logvar


if __name__ == "__main__":
    key = jax.random.PRNGKey(0)
    k_text, k_w, k_b, k_eps, k_text2, k_eps2 = jax.random.split(key, 6)

    # Deterministic synthetic parameters (nn.Linear(t_dim, 2*c_dim, bias=True));
    # PyTorch weight is (2C, T); store it pre-transposed as (T, 2C).
    weight_t = (jax.random.normal(k_w, (TEXT_DIMENSION, 2 * GAN_CONDITION_DIM),
                                  dtype=jnp.float32)
                * (1.0 / jnp.sqrt(TEXT_DIMENSION)))
    bias = 0.1 * jax.random.normal(k_b, (2 * GAN_CONDITION_DIM,), dtype=jnp.float32)

    # Parameter padding / packing done once, outside the per-call path.
    params = ca_net_prepare_params(weight_t, bias)

    # One jitted forward so padding + pallas_call + output slices fuse into a
    # single executable.  force_pallas=True exercises the kernel path here.
    fwd = jax.jit(functools.partial(ca_net_forward, force_pallas=True))

    # --- small batch (single-tile grid) ------------------------------------
    text = jax.random.normal(k_text, (BATCH, TEXT_DIMENSION), dtype=jnp.float32)
    # eps ~ N(0, 1): same role as torch.FloatTensor(std.size()).normal_()
    eps = jax.random.normal(k_eps, (BATCH, GAN_CONDITION_DIM), dtype=jnp.float32)

    c_code, mu, logvar = fwd(text, eps, params)
    jax.block_until_ready((c_code, mu, logvar))

    c_ref, mu_ref, lv_ref = _ca_net_jax(text, weight_t, bias, eps)
    assert jnp.allclose(c_code, c_ref, atol=1e-4, rtol=1e-4)
    assert jnp.allclose(mu, mu_ref, atol=1e-4, rtol=1e-4)
    assert jnp.allclose(logvar, lv_ref, atol=1e-4, rtol=1e-4)

    # --- larger batch (2-step "parallel" grid; both v7x TensorCores) -------
    B2 = 256
    text2 = jax.random.normal(k_text2, (B2, TEXT_DIMENSION), dtype=jnp.float32)
    eps2 = jax.random.normal(k_eps2, (B2, GAN_CONDITION_DIM), dtype=jnp.float32)

    c2, mu2, lv2 = fwd(text2, eps2, params)
    jax.block_until_ready((c2, mu2, lv2))

    c2_ref, mu2_ref, lv2_ref = _ca_net_jax(text2, weight_t, bias, eps2)
    assert jnp.allclose(c2, c2_ref, atol=1e-4, rtol=1e-4)
    assert jnp.allclose(mu2, mu2_ref, atol=1e-4, rtol=1e-4)
    assert jnp.allclose(lv2, lv2_ref, atol=1e-4, rtol=1e-4)

    print("KERNEL_OK")
</pallas_src>

<mosaic_0001>
module attributes {stable_mosaic.version = 11 : i64} {
  func.func @_ca_net_kernel(%arg0: i32, %arg1: memref<8x128xf32, #tpu.memory_space<vmem>>, %arg2: memref<128x128xf32, #tpu.memory_space<vmem>>, %arg3: memref<1x128xf32, #tpu.memory_space<vmem>>, %arg4: memref<128x128xf32, #tpu.memory_space<vmem>>, %arg5: memref<8x128xf32, #tpu.memory_space<vmem>>, %arg6: memref<8x128xf32, #tpu.memory_space<vmem>>, %arg7: memref<8x128xf32, #tpu.memory_space<vmem>>) attributes {dimension_semantics = [#tpu.dimension_semantics<parallel>], iteration_bounds = array<i64: 1>, scalar_prefetch = 0 : i64, scratch_operands = 0 : i64, tpu.core_type = #tpu.core_type<tc>, window_params = [{transform_indices = @transform_0, window_bounds = array<i64: 8, 128>}, {pipeline_mode = #tpu.pipeline_mode<synchronous>, transform_indices = @transform_1, window_bounds = array<i64: 128, 128>}, {pipeline_mode = #tpu.pipeline_mode<synchronous>, transform_indices = @transform_2, window_bounds = array<i64: 1, 128>}, {pipeline_mode = #tpu.pipeline_mode<synchronous>, transform_indices = @transform_3, window_bounds = array<i64: 128, 128>}, {transform_indices = @transform_4, window_bounds = array<i64: 8, 128>}, {transform_indices = @transform_5, window_bounds = array<i64: 8, 128>}, {transform_indices = @transform_6, window_bounds = array<i64: 8, 128>}]} {
    %c0 = arith.constant 0 : index
    %c0_0 = arith.constant 0 : index
    %0 = vector.load %arg1[%c0, %c0_0] : memref<8x128xf32, #tpu.memory_space<vmem>>, vector<8x128xf32>
    %c0_1 = arith.constant 0 : index
    %c0_2 = arith.constant 0 : index
    %1 = vector.load %arg2[%c0_1, %c0_2] : memref<128x128xf32, #tpu.memory_space<vmem>>, vector<128x128xf32>
    %cst = arith.constant dense<0.000000e+00> : vector<8x128xf32>
    %2 = tpu.matmul %0, %1, %cst {dimension_numbers = #tpu.dot_dimension_numbers<[1], [0], [0], [1], [0, 0, 1, 1], [], []>} : vector<8x128xf32>, vector<128x128xf32>, vector<8x128xf32> -> vector<8x128xf32>
    %c0_3 = arith.constant 0 : index
    %c0_4 = arith.constant 0 : index
    %3 = vector.load %arg3[%c0_3, %c0_4] : memref<1x128xf32, #tpu.memory_space<vmem>>, vector<1x128xf32>
    %4 = vector.broadcast %3 : vector<1x128xf32> to vector<8x128xf32>
    %5 = arith.addf %2, %4 : vector<8x128xf32>
    %cst_5 = arith.constant 0.000000e+00 : f32
    %6 = vector.broadcast %cst_5 : f32 to vector<8x128xf32>
    %7 = arith.maximumf %5, %6 : vector<8x128xf32>
    %c0_6 = arith.constant 0 : index
    %c0_7 = arith.constant 0 : index
    %8 = vector.load %arg4[%c0_6, %c0_7] : memref<128x128xf32, #tpu.memory_space<vmem>>, vector<128x128xf32>
    %cst_8 = arith.constant dense<0.000000e+00> : vector<8x128xf32>
    %9 = tpu.matmul %7, %8, %cst_8 {dimension_numbers = #tpu.dot_dimension_numbers<[1], [0], [0], [1], [0, 0, 1, 1], [], []>} : vector<8x128xf32>, vector<128x128xf32>, vector<8x128xf32> -> vector<8x128xf32>
    %cst_9 = arith.constant 5.000000e-01 : f32
    %10 = vector.broadcast %cst_9 : f32 to vector<8x128xf32>
    %11 = arith.mulf %10, %9 : vector<8x128xf32>
    %12 = math.exp %11 : vector<8x128xf32>
    %c0_10 = arith.constant 0 : index
    %c0_11 = arith.constant 0 : index
    %13 = vector.load %arg5[%c0_10, %c0_11] : memref<8x128xf32, #tpu.memory_space<vmem>>, vector<8x128xf32>
    %14 = arith.mulf %13, %12 : vector<8x128xf32>
    %15 = arith.addf %14, %7 : vector<8x128xf32>
    %c0_12 = arith.constant 0 : index
    %c0_13 = arith.constant 0 : index
    %16 = vector.load %arg6[%c0_12, %c0_13] : memref<8x128xf32, #tpu.memory_space<vmem>>, vector<8x128xf32>
    tpu.vector_store %arg6[%c0_12, %c0_13], %7 {strides = array<i32>} : memref<8x128xf32, #tpu.memory_space<vmem>>, vector<8x128xf32>,
    %c0_14 = arith.constant 0 : index
    %c0_15 = arith.constant 0 : index
    %17 = vector.load %arg7[%c0_14, %c0_15] : memref<8x128xf32, #tpu.memory_space<vmem>>, vector<8x128xf32>
    tpu.vector_store %arg7[%c0_14, %c0_15], %15 {strides = array<i32>} : memref<8x128xf32, #tpu.memory_space<vmem>>, vector<8x128xf32>,
    return
  }
  func.func @transform_0(%arg0: i32) -> (i32, i32) {
    %c0_i32 = arith.constant 0 : i32
    %c0_i32_0 = arith.constant 0 : i32
    return %arg0, %c0_i32 : i32, i32
  }
  func.func @transform_1(%arg0: i32) -> (i32, i32) {
    %c0_i32 = arith.constant 0 : i32
    %c0_i32_0 = arith.constant 0 : i32
    %c0_i32_1 = arith.constant 0 : i32
    return %c0_i32, %c0_i32_0 : i32, i32
  }
  func.func @transform_2(%arg0: i32) -> (i32, i32) {
    %c0_i32 = arith.constant 0 : i32
    %c0_i32_0 = arith.constant 0 : i32
    %c0_i32_1 = arith.constant 0 : i32
    return %c0_i32, %c0_i32_0 : i32, i32
  }
  func.func @transform_3(%arg0: i32) -> (i32, i32) {
    %c0_i32 = arith.constant 0 : i32
    %c0_i32_0 = arith.constant 0 : i32
    %c0_i32_1 = arith.constant 0 : i32
    return %c0_i32, %c0_i32_0 : i32, i32
  }
  func.func @transform_4(%arg0: i32) -> (i32, i32) {
    %c0_i32 = arith.constant 0 : i32
    %c0_i32_0 = arith.constant 0 : i32
    return %arg0, %c0_i32 : i32, i32
  }
  func.func @transform_5(%arg0: i32) -> (i32, i32) {
    %c0_i32 = arith.constant 0 : i32
    %c0_i32_0 = arith.constant 0 : i32
    return %arg0, %c0_i32 : i32, i32
  }
  func.func @transform_6(%arg0: i32) -> (i32, i32) {
    %c0_i32 = arith.constant 0 : i32
    %c0_i32_0 = arith.constant 0 : i32
    return %arg0, %c0_i32 : i32, i32
  }
}

</mosaic_0001>

<llo_original>
// kernel: ca_net_forward.1
$region0: #{ca_net_forward.1}
  #allocation0 [shape = 'u32[]', space=smem, size = 0x4, offset = 0x4, fixed_abs, tag = 'smem constant byte address 0x4 - core index']
  #allocation1 [shape = 'u32[72,128]{1,0:T(1,128)}', space=vmem, size = 0x9000, scoped, tag = 'internal scratch']
  %s0 = inlined_call_operand.vmem [shape: f32[8,128], index: 0, kind: input, shape index: {}]
  %s1 = inlined_call_operand.hbm [shape: f32[128,128], index: 1, kind: input, shape index: {}]
  %s2 = inlined_call_operand.vmem [shape: f32[1,128], index: 2, kind: input, shape index: {}]
  %s3 = inlined_call_operand.hbm [shape: f32[128,128], index: 3, kind: input, shape index: {}]
  %s4 = inlined_call_operand.vmem [shape: f32[8,128], index: 4, kind: input, shape index: {}]
  %s5 = inlined_call_operand.vmem [shape: f32[8,128], index: 5, kind: output, shape index: {0}]
  %s6 = inlined_call_operand.hbm [shape: f32[8,128], index: 6, kind: output, shape index: {1}]
  %7 = xla_tuple %s5, %s6
  %s8 = sld [smem:[#allocation0]]
  $region46: #{ca_net_forward.1} parent=0
    _
  %s10 = ssub.s32 1, %s8
  %s11 = scalar_select 0, %s10, %s8
  $region1: #{ca_net_forward.1} parent=0
    #allocation2 [shape = 'u8[65536]{0}', space=vmem, size = 0x10000, scoped, tag = 'input window, operand 1, single buffered']
    #allocation3 [shape = 's32[1]{0}', space=sflag, size = 0x4, scoped, tag = 'scoped memory for ca_net_forward.1']
    #allocation4 [shape = 's32[1]{0}', space=sflag, size = 0x4, scoped, tag = 'scoped memory for ca_net_forward.1']
    #allocation5 [shape = 'u8[65536]{0}', space=vmem, size = 0x10000, scoped, tag = 'input window, operand 3, single buffered']
    #allocation6 [shape = 's32[1]{0}', space=sflag, size = 0x4, scoped, tag = 'scoped memory for ca_net_forward.1']
    #allocation7 [shape = 'u8[4096]{0}', space=vmem, size = 0x1000, scoped, tag = 'output window, operand 1, single buffered']
    %12 = vsyncpa [#allocation3], 0
    %13 = vsyncpa [#allocation6], 0
    %14 = vsyncpa [#allocation4], 0
    // Predicated region
    $region2: #{ca_net_forward.1} parent=1 // pred_check
      _
    $region3: #{ca_net_forward.1} parent=1 // pred_check_branch
      %16 = sbr.rel (0) target = $region5
    $region4: #{ca_net_forward.1} parent=1 // pred_region
      _
    $region5: #{ca_net_forward.1} parent=1 // pred_fallthru
      _
    // Predicated region
    $region6: #{ca_net_forward.1} parent=1 // pred_check
      _
    $region7: #{ca_net_forward.1} parent=1 // pred_check_branch
      %18 = sbr.rel (0) target = $region9
    $region8: #{ca_net_forward.1} parent=1 // pred_region
      %20 = vsyncadd [#allocation3], 0
      %s21 = sshll.u32 %s1, 4
      %s22 = int_to_ptr.hbm [resolvable:$true] %s21
      %s23 = sshll.u32 [#allocation2], 4
      %s24 = int_to_ptr.vmem [resolvable:$true] %s23
      %29 = dma.hbm_to_vmem [thread:$0]  %s22, 2048, %s24, [#allocation3], 128, 128, 8
    $region9: #{ca_net_forward.1} parent=1 // pred_fallthru
      _
    // Predicated region
    $region10: #{ca_net_forward.1} parent=1 // pred_check
      _
    $region11: #{ca_net_forward.1} parent=1 // pred_check_branch
      %31 = sbr.rel (0) target = $region13
    $region12: #{ca_net_forward.1} parent=1 // pred_region
      _
    $region13: #{ca_net_forward.1} parent=1 // pred_fallthru
      _
    // Predicated region
    $region14: #{ca_net_forward.1} parent=1 // pred_check
      _
    $region15: #{ca_net_forward.1} parent=1 // pred_check_branch
      %33 = sbr.rel (0) target = $region17
    $region16: #{ca_net_forward.1} parent=1 // pred_region
      %35 = vsyncadd [#allocation6], 0
      %s36 = sshll.u32 %s3, 4
      %s37 = int_to_ptr.hbm [resolvable:$true] %s36
      %s38 = sshll.u32 [#allocation5], 4
      %s39 = int_to_ptr.vmem [resolvable:$true] %s38
      %44 = dma.hbm_to_vmem [thread:$0]  %s37, 2048, %s39, [#allocation6], 128, 128, 8
    $region17: #{ca_net_forward.1} parent=1 // pred_fallthru
      _
    // Predicated region
    $region18: #{ca_net_forward.1} parent=1 // pred_check
      _
    $region19: #{ca_net_forward.1} parent=1 // pred_check_branch
      %46 = sbr.rel (0) target = $region21
    $region20: #{ca_net_forward.1} parent=1 // pred_region
      _
    $region21: #{ca_net_forward.1} parent=1 // pred_fallthru
      _
    // Predicated region
    $region22: #{ca_net_forward.1} parent=1 // pred_check
      _
    $region23: #{ca_net_forward.1} parent=1 // pred_check_branch
      %48 = sbr.rel (0) target = $region25
    $region24: #{ca_net_forward.1} parent=1 // pred_region
      %50 = dma.done [#allocation3], 2048
    $region25: #{ca_net_forward.1} parent=1 // pred_fallthru
      _
    // Predicated region
    $region26: #{ca_net_forward.1} parent=1 // pred_check
      _
    $region27: #{ca_net_forward.1} parent=1 // pred_check_branch
      %52 = sbr.rel (0) target = $region29
    $region28: #{ca_net_forward.1} parent=1 // pred_region
      %54 = dma.done [#allocation6], 2048
    $region29: #{ca_net_forward.1} parent=1 // pred_fallthru
      _
    %v55 = vld [vmem:[%s0] sm:$0xff]
    %v56 = vld [vmem:[#allocation2] sm:$0xff]
    %v57 = vld [vmem:[#allocation2 + $0x8] sm:$0xff]
    %v58 = vld [vmem:[#allocation2 + $0x10] sm:$0xff]
    %v59 = vld [vmem:[#allocation2 + $0x18] sm:$0xff]
    %v60 = vld [vmem:[#allocation2 + $0x20] sm:$0xff]
    %v61 = vld [vmem:[#allocation2 + $0x28] sm:$0xff]
    %v62 = vld [vmem:[#allocation2 + $0x30] sm:$0xff]
    %v63 = vld [vmem:[#allocation2 + $0x38] sm:$0xff]
    %v64 = vld [vmem:[#allocation2 + $0x40] sm:$0xff]
    %v65 = vld [vmem:[#allocation2 + $0x48] sm:$0xff]
    %v66 = vld [vmem:[#allocation2 + $0x50] sm:$0xff]
    %v67 = vld [vmem:[#allocation2 + $0x58] sm:$0xff]
    %v68 = vld [vmem:[#allocation2 + $0x60] sm:$0xff]
    %v69 = vld [vmem:[#allocation2 + $0x68] sm:$0xff]
    %v70 = vld [vmem:[#allocation2 + $0x70] sm:$0xff]
    %v71 = vld [vmem:[#allocation2 + $0x78] sm:$0xff]
    %v72 = vld [vmem:[%s2] sm:$0x1]
    %v74 = vperm.slane %v72, 0
    %76 = vmatpush.msra.mxu0 %v71
    %77 = vmatpush.msra.mxu0 %v70
    %78 = vmatpush.msra.mxu0 %v69
    %79 = vmatpush.msra.mxu0 %v68
    %80 = vmatpush.msra.mxu0 %v67
    %81 = vmatpush.msra.mxu0 %v66
    %82 = vmatpush.msra.mxu0 %v65
    %83 = vmatpush.msra.mxu0 %v64
    %84 = vmatpush.msra.mxu0 %v63
    %85 = vmatpush.msra.mxu0 %v62
    %86 = vmatpush.msra.mxu0 %v61
    %87 = vmatpush.msra.mxu0 %v60
    %88 = vmatpush.msra.mxu0 %v59
    %89 = vmatpush.msra.mxu0 %v58
    %90 = vmatpush.msra.mxu0 %v57
    %91 = vmatpush.msra.mxu0 %v56
    %92 = vmatmul.f32.gmra.mxu0 %v55
    %v93 = vpop.f32.mrf.mxu0
    %v94 = vadd.f32 %v74, %v93
    %95 = vdwg.mxu0
    %v96 = vmax.f32 %v94, 0.0
    %v97 = vld [vmem:[#allocation5] sm:$0xff]
    %v98 = vld [vmem:[#allocation5 + $0x8] sm:$0xff]
    %v99 = vld [vmem:[#allocation5 + $0x10] sm:$0xff]
    %v100 = vld [vmem:[#allocation5 + $0x18] sm:$0xff]
    %v101 = vld [vmem:[#allocation5 + $0x20] sm:$0xff]
    %v102 = vld [vmem:[#allocation5 + $0x28] sm:$0xff]
    %v103 = vld [vmem:[#allocation5 + $0x30] sm:$0xff]
    %v104 = vld [vmem:[#allocation5 + $0x38] sm:$0xff]
    %v105 = vld [vmem:[#allocation5 + $0x40] sm:$0xff]
    %v106 = vld [vmem:[#allocation5 + $0x48] sm:$0xff]
    %v107 = vld [vmem:[#allocation5 + $0x50] sm:$0xff]
    %v108 = vld [vmem:[#allocation5 + $0x58] sm:$0xff]
    %v109 = vld [vmem:[#allocation5 + $0x60] sm:$0xff]
    %v110 = vld [vmem:[#allocation5 + $0x68] sm:$0xff]
    %v111 = vld [vmem:[#allocation5 + $0x70] sm:$0xff]
    %v112 = vld [vmem:[#allocation5 + $0x78] sm:$0xff]
    %113 = vmatpush.msra.mxu0 %v112
    %114 = vmatpush.msra.mxu0 %v111
    %115 = vmatpush.msra.mxu0 %v110
    %116 = vmatpush.msra.mxu0 %v109
    %117 = vmatpush.msra.mxu0 %v108
    %118 = vmatpush.msra.mxu0 %v107
    %119 = vmatpush.msra.mxu0 %v106
    %120 = vmatpush.msra.mxu0 %v105
    %121 = vmatpush.msra.mxu0 %v104
    %122 = vmatpush.msra.mxu0 %v103
    %123 = vmatpush.msra.mxu0 %v102
    %124 = vmatpush.msra.mxu0 %v101
    %125 = vmatpush.msra.mxu0 %v100
    %126 = vmatpush.msra.mxu0 %v99
    %127 = vmatpush.msra.mxu0 %v98
    %128 = vmatpush.msra.mxu0 %v97
    %129 = vmatmul.f32.gmra.mxu0 %v96
    %v130 = vpop.f32.mrf.mxu0
    %v131 = vadd.f32 0.0, %v130
    %132 = vdwg.mxu0
    %v133 = vmul.f32 %v131, 0.5
    %v134 = vmul.f32 %v133, 1.442695
    %v135 = vpow.pop %v134
    %v136 = vld [vmem:[%s4] sm:$0xff]
    %v137 = vmul.f32 %v136, %v135
    %v138 = vadd.f32 %v137, %v96
    %139 = vst [vmem:[%s5] sm:$0xff] %v96
    %140 = vst [vmem:[#allocation7] sm:$0xff] %v138
    // Predicated region
    $region30: #{ca_net_forward.1} parent=1 // pred_check
      _
    $region31: #{ca_net_forward.1} parent=1 // pred_check_branch
      %142 = sbr.rel (0) target = $region33
    $region32: #{ca_net_forward.1} parent=1 // pred_region
      _
    $region33: #{ca_net_forward.1} parent=1 // pred_fallthru
      _
    // Predicated region
    $region34: #{ca_net_forward.1} parent=1 // pred_check
      _
    $region35: #{ca_net_forward.1} parent=1 // pred_check_branch
      %144 = sbr.rel (0) target = $region37
    $region36: #{ca_net_forward.1} parent=1 // pred_region
      %146 = vsyncadd [#allocation4], 0
      %s148 = sshll.u32 [#allocation7], 4
      %s149 = int_to_ptr.vmem [resolvable:$true] %s148
      %s150 = sshll.u32 %s6, 4
      %s151 = int_to_ptr.hbm [resolvable:$true] %s150
      %153 = dma.vmem_to_hbm [thread:$0]  %s149, 128, %s151, [#allocation4]
    $region37: #{ca_net_forward.1} parent=1 // pred_fallthru
      _
    // Predicated region
    $region38: #{ca_net_forward.1} parent=1 // pred_check
      _
    $region39: #{ca_net_forward.1} parent=1 // pred_check_branch
      %155 = sbr.rel (0) target = $region41
    $region40: #{ca_net_forward.1} parent=1 // pred_region
      _
    $region41: #{ca_net_forward.1} parent=1 // pred_fallthru
      _
    // Predicated region
    $region42: #{ca_net_forward.1} parent=1 // pred_check
      _
    $region43: #{ca_net_forward.1} parent=1 // pred_check_branch
      %157 = sbr.rel (0) target = $region45
    $region44: #{ca_net_forward.1} parent=1 // pred_region
      %159 = dma.done [#allocation4], 128
    $region45: #{ca_net_forward.1} parent=1 // pred_fallthru
      _
    %160 = vsyncpa [#allocation3], 1
    %161 = vsyncpa [#allocation6], 1
    %162 = vsyncpa [#allocation4], 1

</llo_original>
